<compile_context>
chip_gen: v5e
topology: v5e:2x2
jax: 0.10.0
libtpu: 0.0.40
codegen_flags: <defaults>
</compile_context>

<pallas_src>
import math

import jax
import jax.numpy as jnp
from jax.experimental import pallas as pl
from jax.experimental.pallas import tpu as pltpu

_LANES = 128
_SUBLANES = 8

# Per-array size below which we use a single grid-less pallas_call.
# Kept small (1 MiB) so mid-size inputs take the parallel grid path and can
# shard across v7x's two TensorCores.
_GRIDLESS_MAX_BYTES = 1 << 20

# Target bytes per array per block for the grid path.  Double-buffered:
# 3 arrays x 2 buffers x 2 MiB = 12 MiB  -> fits v5e's 16 MiB scoped-VMEM
# default and v7x's 32 MiB default with headroom.
_TARGET_BLOCK_BYTES = 2 << 20


def _add_kernel(x_ref, y_ref, o_ref):
    # Single VPU elementwise add over the current VMEM tile.
    o_ref[...] = x_ref[...] + y_ref[...]


def _round_up(a: int, m: int) -> int:
    return ((a + m - 1) // m) * m


def add_module2(x: jax.Array, y: jax.Array) -> jax.Array:
    """Pallas implementation of AddModule2.forward: x + y."""
    assert x.shape == y.shape, "AddModule2 expects same-shape inputs"
    assert x.dtype == y.dtype, "AddModule2 expects same-dtype inputs"

    orig_shape = x.shape
    n = math.prod(orig_shape) if orig_shape else 1
    if n == 0:
        return jnp.zeros(orig_shape, dtype=x.dtype)

    itemsize = jnp.dtype(x.dtype).itemsize
    total_bytes = n * itemsize

    # Free 2-D view: collapse all-but-last dims into a row axis.
    if x.ndim >= 2:
        cols = orig_shape[-1]
        rows = n // cols
    else:
        rows, cols = 1, n
    x2 = x.reshape(rows, cols)
    y2 = y.reshape(rows, cols)

    if total_bytes <= _GRIDLESS_MAX_BYTES:
        # Small path: whole arrays resident in VMEM, no grid, no padding.
        out2 = pl.pallas_call(
            _add_kernel,
            out_shape=jax.ShapeDtypeStruct((rows, cols), x.dtype),
            in_specs=[
                pl.BlockSpec(memory_space=pltpu.MemorySpace.VMEM),
                pl.BlockSpec(memory_space=pltpu.MemorySpace.VMEM),
            ],
            out_specs=pl.BlockSpec(memory_space=pltpu.MemorySpace.VMEM),
        )(x2, y2)
        return out2.reshape(orig_shape)

    row_bytes = cols * itemsize
    if row_bytes <= _TARGET_BLOCK_BYTES:
        # Tile rows only; last dim at full extent (exempt from the 128 rule).
        block_rows = max(
            _SUBLANES,
            (_TARGET_BLOCK_BYTES // row_bytes) // _SUBLANES * _SUBLANES,
        )
        # Ensure >= 2 blocks when possible so v7x's 2 TensorCores both work.
        two_way = _round_up(pl.cdiv(rows, 2), _SUBLANES)
        block_rows = min(block_rows, two_way)
        if block_rows >= rows:
            block_rows = rows  # single full-extent block (exempt from 8-rule)

        spec = pl.BlockSpec((block_rows, cols), lambda i: (i, 0))
        out2 = pl.pallas_call(
            _add_kernel,
            out_shape=jax.ShapeDtypeStruct((rows, cols), x.dtype),
            grid=(pl.cdiv(rows, block_rows),),
            in_specs=[spec, spec],
            out_specs=spec,
            compiler_params=pltpu.CompilerParams(
                dimension_semantics=("parallel",),
            ),
        )(x2, y2)
    else:
        # A single row exceeds the block budget: tile both dims.
        block_rows = rows if rows < _SUBLANES else _SUBLANES
        block_cols = max(
            _LANES,
            (_TARGET_BLOCK_BYTES // (block_rows * itemsize)) // _LANES * _LANES,
        )
        if block_cols >= cols:
            block_cols = cols  # full extent, exempt from the 128 rule

        spec = pl.BlockSpec((block_rows, block_cols), lambda i, j: (i, j))
        out2 = pl.pallas_call(
            _add_kernel,
            out_shape=jax.ShapeDtypeStruct((rows, cols), x.dtype),
            grid=(pl.cdiv(rows, block_rows), pl.cdiv(cols, block_cols)),
            in_specs=[spec, spec],
            out_specs=spec,
            compiler_params=pltpu.CompilerParams(
                dimension_semantics=("parallel", "parallel"),
            ),
        )(x2, y2)

    return out2.reshape(orig_shape)


if __name__ == "__main__":
    key = jax.random.PRNGKey(0)
    kx, ky, kx2, ky2, kx3, ky3, kx4, ky4 = jax.random.split(key, 8)

    # Matches the module's example_input: two int32 vectors of length 5.
    x = jax.random.randint(kx, (5,), minval=-100, maxval=100, dtype=jnp.int32)
    y = jax.random.randint(ky, (5,), minval=-100, maxval=100, dtype=jnp.int32)
    out = add_module2(x, y)
    jax.block_until_ready(out)
    assert out.shape == (5,)
    assert out.dtype == jnp.int32
    assert bool(jnp.all(out == x + y))

    # Small 2-D grid-less path (no padding, ragged dims).
    xb = jax.random.randint(kx2, (4, 1000), minval=-1000, maxval=1000, dtype=jnp.int32)
    yb = jax.random.randint(ky2, (4, 1000), minval=-1000, maxval=1000, dtype=jnp.int32)
    outb = add_module2(xb, yb)
    jax.block_until_ready(outb)
    assert bool(jnp.all(outb == xb + yb))

    # Row-tiled parallel grid path with a ragged edge block.
    xc = jax.random.randint(kx3, (600, 1000), minval=-1000, maxval=1000, dtype=jnp.int32)
    yc = jax.random.randint(ky3, (600, 1000), minval=-1000, maxval=1000, dtype=jnp.int32)
    outc = add_module2(xc, yc)
    jax.block_until_ready(outc)
    assert bool(jnp.all(outc == xc + yc))

    # Wide-row path: a single row exceeds the block budget -> tile cols too.
    xd = jax.random.randint(kx4, (2, 600000), minval=-1000, maxval=1000, dtype=jnp.int32)
    yd = jax.random.randint(ky4, (2, 600000), minval=-1000, maxval=1000, dtype=jnp.int32)
    outd = add_module2(xd, yd)
    jax.block_until_ready(outd)
    assert bool(jnp.all(outd == xd + yd))

    print("KERNEL_OK")
</pallas_src>

<mosaic_0001>
module attributes {stable_mosaic.version = 11 : i64} {
  func.func @_add_kernel(%arg0: memref<1x5xi32, #tpu.memory_space<vmem>>, %arg1: memref<1x5xi32, #tpu.memory_space<vmem>>, %arg2: memref<1x5xi32, #tpu.memory_space<vmem>>) attributes {dimension_semantics = [], scalar_prefetch = 0 : i64, scratch_operands = 0 : i64, tpu.core_type = #tpu.core_type<tc>} {
    %c0 = arith.constant 0 : index
    %c0_0 = arith.constant 0 : index
    %0 = vector.load %arg0[%c0, %c0_0] : memref<1x5xi32, #tpu.memory_space<vmem>>, vector<1x5xi32>
    %c0_1 = arith.constant 0 : index
    %c0_2 = arith.constant 0 : index
    %1 = vector.load %arg1[%c0_1, %c0_2] : memref<1x5xi32, #tpu.memory_space<vmem>>, vector<1x5xi32>
    %2 = arith.addi %0, %1 : vector<1x5xi32>
    %c0_3 = arith.constant 0 : index
    %c0_4 = arith.constant 0 : index
    %3 = vector.load %arg2[%c0_3, %c0_4] : memref<1x5xi32, #tpu.memory_space<vmem>>, vector<1x5xi32>
    tpu.vector_store %arg2[%c0_3, %c0_4], %2 {strides = array<i32>} : memref<1x5xi32, #tpu.memory_space<vmem>>, vector<1x5xi32>,
    return
  }
}

</mosaic_0001>

<llo_original>
// kernel: tpu_custom_call.1
$region0: #{tpu_custom_call.1}
  #allocation0 [shape = 'u32[]', space=smem, size = 0x4, offset = 0x4, fixed_abs, tag = 'smem constant byte address 0x4 - core index']
  #allocation1 [shape = 'u32[72,128]{1,0:T(1,128)}', space=vmem, size = 0x9000, scoped, tag = 'internal scratch']
  %s0 = inlined_call_operand.hbm [shape: s32[1,5], index: 0, kind: input, shape index: {}]
  %s1 = inlined_call_operand.hbm [shape: s32[1,5], index: 1, kind: input, shape index: {}]
  %s2 = inlined_call_operand.hbm [shape: s32[1,5], index: 2, kind: output, shape index: {}]
  %s3 = sld [smem:[#allocation0]]
  $region26: #{tpu_custom_call.1} parent=0
    _
  %s5 = ssub.s32 1, %s3
  %s6 = scalar_select 0, %s5, %s3
  $region1: #{tpu_custom_call.1} parent=0
    #allocation2 [shape = 'u8[512]{0}', space=vmem, size = 0x400, scoped, tag = 'input window, operand 0, single buffered']
    #allocation3 [shape = 's32[1]{0}', space=sflag, size = 0x4, scoped, tag = 'scoped memory for tpu_custom_call.1']
    #allocation4 [shape = 's32[1]{0}', space=sflag, size = 0x4, scoped, tag = 'scoped memory for tpu_custom_call.1']
    #allocation5 [shape = 'u8[512]{0}', space=vmem, size = 0x400, scoped, tag = 'input window, operand 1, single buffered']
    #allocation6 [shape = 's32[1]{0}', space=sflag, size = 0x4, scoped, tag = 'scoped memory for tpu_custom_call.1']
    #allocation7 [shape = 'u8[512]{0}', space=vmem, size = 0x400, scoped, tag = 'output window, operand 0, single buffered']
    %7 = vsyncpa [#allocation3], 0
    %8 = vsyncpa [#allocation6], 0
    %9 = vsyncpa [#allocation4], 0
    // Predicated region
    $region2: #{tpu_custom_call.1} parent=1 // pred_check
      _
    $region3: #{tpu_custom_call.1} parent=1 // pred_check_branch
      %11 = sbr.rel (0) target = $region5
    $region4: #{tpu_custom_call.1} parent=1 // pred_region
      %13 = vsyncadd [#allocation3], 0
      %s15 = sshll.u32 %s0, 4
      %s16 = int_to_ptr.hbm [resolvable:$true] %s15
      %s17 = sshll.u32 [#allocation2], 4
      %s18 = int_to_ptr.vmem [resolvable:$true] %s17
      %20 = dma.hbm_to_vmem [thread:$0]  %s16, 16, %s18, [#allocation3]
    $region5: #{tpu_custom_call.1} parent=1 // pred_fallthru
      _
    // Predicated region
    $region6: #{tpu_custom_call.1} parent=1 // pred_check
      _
    $region7: #{tpu_custom_call.1} parent=1 // pred_check_branch
      %22 = sbr.rel (0) target = $region9
    $region8: #{tpu_custom_call.1} parent=1 // pred_region
      %24 = vsyncadd [#allocation6], 0
      %s26 = sshll.u32 %s1, 4
      %s27 = int_to_ptr.hbm [resolvable:$true] %s26
      %s28 = sshll.u32 [#allocation5], 4
      %s29 = int_to_ptr.vmem [resolvable:$true] %s28
      %31 = dma.hbm_to_vmem [thread:$0]  %s27, 16, %s29, [#allocation6]
    $region9: #{tpu_custom_call.1} parent=1 // pred_fallthru
      _
    // Predicated region
    $region10: #{tpu_custom_call.1} parent=1 // pred_check
      _
    $region11: #{tpu_custom_call.1} parent=1 // pred_check_branch
      %33 = sbr.rel (0) target = $region13
    $region12: #{tpu_custom_call.1} parent=1 // pred_region
      %35 = dma.done [#allocation3], 16
    $region13: #{tpu_custom_call.1} parent=1 // pred_fallthru
      _
    // Predicated region
    $region14: #{tpu_custom_call.1} parent=1 // pred_check
      _
    $region15: #{tpu_custom_call.1} parent=1 // pred_check_branch
      %37 = sbr.rel (0) target = $region17
    $region16: #{tpu_custom_call.1} parent=1 // pred_region
      %39 = dma.done [#allocation6], 16
    $region17: #{tpu_custom_call.1} parent=1 // pred_fallthru
      _
    %v40 = vld [vmem:[#allocation2] sm:$0x1]
    %v41 = vld [vmem:[#allocation5] sm:$0x1]
    %v42 = vadd.s32 %v40, %v41
    %vm43 = vcmask 32768
    %44 = vst.msk [vmem:[#allocation7] sm:$0x1] %vm43, %v42
    // Predicated region
    $region18: #{tpu_custom_call.1} parent=1 // pred_check
      _
    $region19: #{tpu_custom_call.1} parent=1 // pred_check_branch
      %46 = sbr.rel (0) target = $region21
    $region20: #{tpu_custom_call.1} parent=1 // pred_region
      %48 = vsyncadd [#allocation4], 0
      %s50 = sshll.u32 [#allocation7], 4
      %s51 = int_to_ptr.vmem [resolvable:$true] %s50
      %s52 = sshll.u32 %s2, 4
      %s53 = int_to_ptr.hbm [resolvable:$true] %s52
      %55 = dma.vmem_to_hbm [thread:$0]  %s51, 16, %s53, [#allocation4]
    $region21: #{tpu_custom_call.1} parent=1 // pred_fallthru
      _
    // Predicated region
    $region22: #{tpu_custom_call.1} parent=1 // pred_check
      _
    $region23: #{tpu_custom_call.1} parent=1 // pred_check_branch
      %57 = sbr.rel (0) target = $region25
    $region24: #{tpu_custom_call.1} parent=1 // pred_region
      %59 = dma.done [#allocation4], 16
    $region25: #{tpu_custom_call.1} parent=1 // pred_fallthru
      _
    %60 = vsyncpa [#allocation3], 1
    %61 = vsyncpa [#allocation6], 1
    %62 = vsyncpa [#allocation4], 1

</llo_original>
